<compile_context>
chip_gen: v7x
topology: tpu7x:2x2x1
jax: 0.10.0
libtpu: 0.0.40
codegen_flags: <defaults>
</compile_context>

<pallas_src>
import jax
import jax.numpy as jnp
from jax.experimental import pallas as pl
from jax.experimental.pallas import tpu as pltpu  # noqa: F401  (TPU backend)

# Problem sizes (small, consistent with the module's __init__ / forward)
N, C_IN, H, W = 2, 4, 16, 16
C_OUT = 8
KH = KW = 3
PAD = 1
EPS = 1e-5
KK = KH * KW * C_IN          # 36  (im2col contraction depth)
NHW = N * H * W              # 512 (lane-dense batch*spatial axis, 4 x 128 lanes)


def upernet_convmodule_kernel(p_ref, w_ref, gb_ref, out_ref):
    """Fused conv3x3 (no bias) + BatchNorm2d (batch stats) + ReLU.

    p_ref:   (KK, NHW)    = (36, 512)  im2col patches (row = c*9 + ky*3 + kx, col = n*HW + h*W + w)
    w_ref:   (C_OUT, KK)  = (8, 36)    flattened conv weights
    gb_ref:  (C_OUT, 2)                [:, 0] = BN gamma, [:, 1] = BN beta
    out_ref: (C_OUT, NHW) = (8, 512)   lane-dense output
    """
    # Whole convolution as a single MXU matmul; accumulator is 4 fully packed vregs.
    acc = jnp.dot(w_ref[...], p_ref[...], preferred_element_type=jnp.float32)  # (C_OUT, NHW)

    # BatchNorm2d, single pass: per-channel sum / sum-of-squares over the lane axis.
    cnt = jnp.float32(NHW)
    s = jnp.sum(acc, axis=1, keepdims=True)            # (C_OUT, 1)
    ss = jnp.sum(acc * acc, axis=1, keepdims=True)      # (C_OUT, 1)
    mean = s / cnt
    var = ss / cnt - mean * mean                         # biased batch variance

    gamma = gb_ref[:, 0:1]                               # (C_OUT, 1)
    beta = gb_ref[:, 1:2]                                # (C_OUT, 1)
    scale = gamma * jax.lax.rsqrt(var + EPS)
    shift = beta - mean * scale

    # Affine BN + ReLU, stored lane-dense (unmasked vector stores).
    out_ref[...] = jnp.maximum(acc * scale + shift, 0.0)


def upernet_conv_module(x_nchw, weight_oihw, gamma, beta):
    """Wrapper: NCHW in, NCHW out (matches the PyTorch module I/O)."""
    x = x_nchw.astype(jnp.float32)
    w = weight_oihw.astype(jnp.float32)

    # im2col in plain JAX (fused by XLA outside the kernel; ~72 KB intermediate).
    # Row order (c, ky, kx) matches weight.reshape(C_OUT, C_IN*KH*KW); columns are (n, h, w).
    x_pad = jnp.pad(x, ((0, 0), (0, 0), (PAD, PAD), (PAD, PAD)))                # (N, C_IN, HP, WP)
    taps = [x_pad[:, :, ky:ky + H, kx:kx + W]                                   # each (N, C_IN, H, W)
            for ky in range(KH) for kx in range(KW)]
    patches = jnp.stack(taps, axis=0)                                           # (9, N, C_IN, H, W)
    patches = patches.transpose(2, 0, 1, 3, 4).reshape(KK, NHW)                 # (36, 512)

    w_flat = w.reshape(C_OUT, KK)                                               # (8, 36)
    gb = jnp.stack([gamma.astype(jnp.float32),
                    beta.astype(jnp.float32)], axis=1)                          # (C_OUT, 2)

    out2d = pl.pallas_call(
        upernet_convmodule_kernel,
        out_shape=jax.ShapeDtypeStruct((C_OUT, NHW), jnp.float32),
        grid=(1,),  # whole (small) problem in one step: BN needs full-batch statistics
        in_specs=[
            pl.BlockSpec((KK, NHW), lambda i: (0, 0)),
            pl.BlockSpec((C_OUT, KK), lambda i: (0, 0)),
            pl.BlockSpec((C_OUT, 2), lambda i: (0, 0)),
        ],
        out_specs=pl.BlockSpec((C_OUT, NHW), lambda i: (0, 0)),
    )(patches, w_flat, gb)

    # (C_OUT, N*H*W) -> NCHW; tiny (16 KB) reshape/transpose handled by XLA outside the kernel.
    return out2d.reshape(C_OUT, N, H, W).transpose(1, 0, 2, 3)


def _reference(x_nchw, weight_oihw, gamma, beta):
    """Pure-JAX reference reproducing the PyTorch forward."""
    conv = jax.lax.conv_general_dilated(
        x_nchw, weight_oihw, window_strides=(1, 1),
        padding=((PAD, PAD), (PAD, PAD)),
        dimension_numbers=("NCHW", "OIHW", "NCHW"))
    mean = conv.mean(axis=(0, 2, 3), keepdims=True)
    var = conv.var(axis=(0, 2, 3), keepdims=True)  # biased variance (BN normalization)
    bn = (conv - mean) / jnp.sqrt(var + EPS) * gamma.reshape(1, -1, 1, 1) \
         + beta.reshape(1, -1, 1, 1)
    return jnp.maximum(bn, 0.0)


if __name__ == "__main__":
    key = jax.random.PRNGKey(0)
    kx, kw = jax.random.split(key)

    # Deterministic synthetic parameters (shapes from the module's __init__):
    #   conv.weight: (C_OUT, C_IN, KH, KW), no bias
    #   batch_norm.weight/bias: (C_OUT,)  (non-trivial values to exercise the affine path)
    x = jax.random.normal(kx, (N, C_IN, H, W), dtype=jnp.float32)
    weight = jax.random.normal(kw, (C_OUT, C_IN, KH, KW), dtype=jnp.float32) * 0.1
    gamma = 1.0 + 0.1 * jnp.arange(C_OUT, dtype=jnp.float32)
    beta = 0.05 * jnp.arange(C_OUT, dtype=jnp.float32)

    out = upernet_conv_module(x, weight, gamma, beta)
    out = jax.block_until_ready(out)

    ref = _reference(x, weight, gamma, beta)
    assert out.shape == (N, C_OUT, H, W), out.shape
    assert jnp.allclose(out, ref, atol=1e-4, rtol=1e-4), float(jnp.abs(out - ref).max())

    print("KERNEL_OK")
</pallas_src>

<mosaic_0001>
module attributes {stable_mosaic.version = 11 : i64} {
  func.func @upernet_convmodule_kernel(%arg0: i32, %arg1: memref<36x512xf32, #tpu.memory_space<vmem>>, %arg2: memref<8x36xf32, #tpu.memory_space<vmem>>, %arg3: memref<8x2xf32, #tpu.memory_space<vmem>>, %arg4: memref<8x512xf32, #tpu.memory_space<vmem>>) attributes {dimension_semantics = [#tpu.dimension_semantics<arbitrary>], iteration_bounds = array<i64: 1>, scalar_prefetch = 0 : i64, scratch_operands = 0 : i64, tpu.core_type = #tpu.core_type<tc>, window_params = [{pipeline_mode = #tpu.pipeline_mode<synchronous>, transform_indices = @transform_0, window_bounds = array<i64: 36, 512>}, {pipeline_mode = #tpu.pipeline_mode<synchronous>, transform_indices = @transform_1, window_bounds = array<i64: 8, 36>}, {pipeline_mode = #tpu.pipeline_mode<synchronous>, transform_indices = @transform_2, window_bounds = array<i64: 8, 2>}, {pipeline_mode = #tpu.pipeline_mode<synchronous>, transform_indices = @transform_3, window_bounds = array<i64: 8, 512>}]} {
    %c0 = arith.constant 0 : index
    %c0_0 = arith.constant 0 : index
    %0 = vector.load %arg2[%c0, %c0_0] : memref<8x36xf32, #tpu.memory_space<vmem>>, vector<8x36xf32>
    %c0_1 = arith.constant 0 : index
    %c0_2 = arith.constant 0 : index
    %1 = vector.load %arg1[%c0_1, %c0_2] : memref<36x512xf32, #tpu.memory_space<vmem>>, vector<36x512xf32>
    %cst = arith.constant dense<0.000000e+00> : vector<8x512xf32>
    %2 = tpu.matmul %0, %1, %cst {dimension_numbers = #tpu.dot_dimension_numbers<[1], [0], [0], [1], [0, 0, 1, 1], [], []>} : vector<8x36xf32>, vector<36x512xf32>, vector<8x512xf32> -> vector<8x512xf32>
    %cst_3 = arith.constant dense<0.000000e+00> : vector<8xf32>
    %3 = vector.multi_reduction <add>, %2, %cst_3 [1] : vector<8x512xf32> to vector<8xf32>
    %4 = vector.shape_cast %3 : vector<8xf32> to vector<8x1xf32>
    %5 = arith.mulf %2, %2 : vector<8x512xf32>
    %cst_4 = arith.constant dense<0.000000e+00> : vector<8xf32>
    %6 = vector.multi_reduction <add>, %5, %cst_4 [1] : vector<8x512xf32> to vector<8xf32>
    %7 = vector.shape_cast %6 : vector<8xf32> to vector<8x1xf32>
    %cst_5 = arith.constant 5.120000e+02 : f32
    %8 = vector.broadcast %cst_5 : f32 to vector<8x1xf32>
    %9 = arith.divf %4, %8 : vector<8x1xf32>
    %cst_6 = arith.constant 5.120000e+02 : f32
    %10 = vector.broadcast %cst_6 : f32 to vector<8x1xf32>
    %11 = arith.divf %7, %10 : vector<8x1xf32>
    %12 = arith.mulf %9, %9 : vector<8x1xf32>
    %13 = arith.subf %11, %12 : vector<8x1xf32>
    %c0_7 = arith.constant 0 : index
    %c0_8 = arith.constant 0 : index
    %14 = vector.load %arg3[%c0_7, %c0_8] : memref<8x2xf32, #tpu.memory_space<vmem>>, vector<8x1xf32>
    %c0_9 = arith.constant 0 : index
    %c1 = arith.constant 1 : index
    %15 = vector.load %arg3[%c0_9, %c1] : memref<8x2xf32, #tpu.memory_space<vmem>>, vector<8x1xf32>
    %cst_10 = arith.constant 9.99999974E-6 : f32
    %16 = vector.broadcast %cst_10 : f32 to vector<8x1xf32>
    %17 = arith.addf %13, %16 : vector<8x1xf32>
    %18 = math.rsqrt %17 : vector<8x1xf32>
    %19 = arith.mulf %14, %18 : vector<8x1xf32>
    %20 = arith.mulf %9, %19 : vector<8x1xf32>
    %21 = arith.subf %15, %20 : vector<8x1xf32>
    %22 = vector.broadcast %19 : vector<8x1xf32> to vector<8x512xf32>
    %23 = arith.mulf %2, %22 : vector<8x512xf32>
    %24 = vector.broadcast %21 : vector<8x1xf32> to vector<8x512xf32>
    %25 = arith.addf %23, %24 : vector<8x512xf32>
    %cst_11 = arith.constant 0.000000e+00 : f32
    %26 = vector.broadcast %cst_11 : f32 to vector<8x512xf32>
    %27 = arith.maximumf %25, %26 : vector<8x512xf32>
    %c0_12 = arith.constant 0 : index
    %c0_13 = arith.constant 0 : index
    %28 = vector.load %arg4[%c0_12, %c0_13] : memref<8x512xf32, #tpu.memory_space<vmem>>, vector<8x512xf32>
    tpu.vector_store %arg4[%c0_12, %c0_13], %27 {strides = array<i32>} : memref<8x512xf32, #tpu.memory_space<vmem>>, vector<8x512xf32>,
    return
  }
  func.func @transform_0(%arg0: i32) -> (i32, i32) {
    %c0_i32 = arith.constant 0 : i32
    %c0_i32_0 = arith.constant 0 : i32
    %c0_i32_1 = arith.constant 0 : i32
    return %c0_i32, %c0_i32_0 : i32, i32
  }
  func.func @transform_1(%arg0: i32) -> (i32, i32) {
    %c0_i32 = arith.constant 0 : i32
    %c0_i32_0 = arith.constant 0 : i32
    %c0_i32_1 = arith.constant 0 : i32
    return %c0_i32, %c0_i32_0 : i32, i32
  }
  func.func @transform_2(%arg0: i32) -> (i32, i32) {
    %c0_i32 = arith.constant 0 : i32
    %c0_i32_0 = arith.constant 0 : i32
    %c0_i32_1 = arith.constant 0 : i32
    return %c0_i32, %c0_i32_0 : i32, i32
  }
  func.func @transform_3(%arg0: i32) -> (i32, i32) {
    %c0_i32 = arith.constant 0 : i32
    %c0_i32_0 = arith.constant 0 : i32
    %c0_i32_1 = arith.constant 0 : i32
    return %c0_i32, %c0_i32_0 : i32, i32
  }
}

</mosaic_0001>

<llo_original>
// kernel: tpu_custom_call.1
$region0: #{tpu_custom_call.1}
  #allocation0 [shape = 'u32[]', space=smem, size = 0x4, offset = 0x4, fixed_abs, tag = 'smem constant byte address 0x4 - core index']
  #allocation1 [shape = 'u32[144,128]{1,0:T(1,128)}', space=vmem, size = 0x12000, scoped, tag = 'internal scratch']
  %s0 = inlined_call_operand.hbm [shape: f32[36,512], index: 0, kind: input, shape index: {}]
  %s1 = inlined_call_operand.vmem [shape: f32[8,36], index: 1, kind: input, shape index: {}]
  %s2 = inlined_call_operand.vmem [shape: f32[8,2], index: 2, kind: input, shape index: {}]
  %s3 = inlined_call_operand.hbm [shape: f32[8,512], index: 3, kind: output, shape index: {}]
  %s4 = sld [smem:[#allocation0]]
  $region26: #{tpu_custom_call.1} parent=0
    _
  %s6 = ssub.s32 1, %s4
  %s7 = scalar_select 0, %s6, %s4
  $region1: #{tpu_custom_call.1} parent=0
    #allocation2 [shape = 'u8[81920]{0}', space=vmem, size = 0x14000, scoped, tag = 'input window, operand 0, single buffered']
    #allocation3 [shape = 's32[1]{0}', space=sflag, size = 0x4, scoped, tag = 'scoped memory for tpu_custom_call.1']
    #allocation4 [shape = 's32[1]{0}', space=sflag, size = 0x4, scoped, tag = 'scoped memory for tpu_custom_call.1']
    #allocation5 [shape = 'u8[16384]{0}', space=vmem, size = 0x4000, scoped, tag = 'output window, operand 0, single buffered']
    %8 = vsyncpa [#allocation3], 0
    %9 = vsyncpa [#allocation4], 0
    // Predicated region
    $region2: #{tpu_custom_call.1} parent=1 // pred_check
      _
    $region3: #{tpu_custom_call.1} parent=1 // pred_check_branch
      %11 = sbr.rel (0) target = $region5
    $region4: #{tpu_custom_call.1} parent=1 // pred_region
      %s13 = ssub.s32 2560, 2560
      %14 = vsyncadd [#allocation3], %s13
      %s15 = sshll.u32 [#allocation2], 4
      %s16 = int_to_ptr.vmem [resolvable:$true] %s15
      %21 = dma.hbm_to_vmem [thread:$0]  %s0, 2560, %s16, [#allocation3], 512, 512, 32
    $region5: #{tpu_custom_call.1} parent=1 // pred_fallthru
      _
    // Predicated region
    $region6: #{tpu_custom_call.1} parent=1 // pred_check
      _
    $region7: #{tpu_custom_call.1} parent=1 // pred_check_branch
      %23 = sbr.rel (0) target = $region9
    $region8: #{tpu_custom_call.1} parent=1 // pred_region
      _
    $region9: #{tpu_custom_call.1} parent=1 // pred_fallthru
      _
    // Predicated region
    $region10: #{tpu_custom_call.1} parent=1 // pred_check
      _
    $region11: #{tpu_custom_call.1} parent=1 // pred_check_branch
      %25 = sbr.rel (0) target = $region13
    $region12: #{tpu_custom_call.1} parent=1 // pred_region
      _
    $region13: #{tpu_custom_call.1} parent=1 // pred_fallthru
      _
    // Predicated region
    $region14: #{tpu_custom_call.1} parent=1 // pred_check
      _
    $region15: #{tpu_custom_call.1} parent=1 // pred_check_branch
      %27 = sbr.rel (0) target = $region17
    $region16: #{tpu_custom_call.1} parent=1 // pred_region
      %28 = dma.done [#allocation3], 2560
    $region17: #{tpu_custom_call.1} parent=1 // pred_fallthru
      _
    %v29 = vld [vmem:[%s1] sm:$0xff]
    %v30 = vld [vmem:[#allocation2] sm:$0xff]
    %v31 = vld [vmem:[#allocation2 + $0x8] sm:$0xff]
    %v32 = vld [vmem:[#allocation2 + $0x10] sm:$0xff]
    %v33 = vld [vmem:[#allocation2 + $0x18] sm:$0xff]
    %v34 = vld [vmem:[#allocation2 + $0x20] sm:$0xff]
    %v35 = vld [vmem:[#allocation2 + $0x28] sm:$0xff]
    %v36 = vld [vmem:[#allocation2 + $0x30] sm:$0xff]
    %v37 = vld [vmem:[#allocation2 + $0x38] sm:$0xff]
    %v38 = vld [vmem:[#allocation2 + $0x40] sm:$0xff]
    %v39 = vld [vmem:[#allocation2 + $0x48] sm:$0xff]
    %v40 = vld [vmem:[#allocation2 + $0x50] sm:$0xff]
    %v41 = vld [vmem:[#allocation2 + $0x58] sm:$0xff]
    %v42 = vld [vmem:[#allocation2 + $0x60] sm:$0xff]
    %v43 = vld [vmem:[#allocation2 + $0x68] sm:$0xff]
    %v44 = vld [vmem:[#allocation2 + $0x70] sm:$0xff]
    %v45 = vld [vmem:[#allocation2 + $0x78] sm:$0xff]
    %v46 = vld [vmem:[#allocation2 + $0x80] sm:$0xf]
    %v47 = vld [vmem:[#allocation2 + $0x88] sm:$0xf]
    %v48 = vld [vmem:[#allocation2 + $0x90] sm:$0xf]
    %v49 = vld [vmem:[#allocation2 + $0x98] sm:$0xf]
    %vm50 = vcmask 293888
    %v52 = vsel %vm50, %v29, 0
    %vm54 = vcmask 1043456
    %v56 = vsel %vm54, %v46, 0
    %v59 = vsel %vm54, %v47, 0
    %v62 = vsel %vm54, %v48, 0
    %v65 = vsel %vm54, %v49, 0
    %67 = vmatprep.subr.mxu0 %v31
    %68 = vmatpush1.msra.mxu0 %v30
    %69 = vmatprep.subr.mxu0 %v35
    %70 = vmatpush1.msra.mxu0 %v34
    %71 = vmatprep.subr.mxu0 %v39
    %72 = vmatpush1.msra.mxu0 %v38
    %73 = vmatprep.subr.mxu0 %v43
    %74 = vmatpush1.msra.mxu0 %v42
    %75 = vmatprep.subr.mxu0 %v59
    %76 = vmatpush1.msra.mxu0 %v56
    %77 = vmatprep.subr.mxu0 0.0
    %78 = vmatpush1.msra.mxu0 0.0
    %79 = vmatprep.subr.mxu0 0.0
    %80 = vmatpush1.msra.mxu0 0.0
    %81 = vmatprep.subr.mxu0 0.0
    %82 = vmatpush1.msra.mxu0 0.0
    %83 = vmatprep.subr.mxu0 0.0
    %84 = vmatpush1.msra.mxu0 0.0
    %85 = vmatprep.subr.mxu0 0.0
    %86 = vmatpush1.msra.mxu0 0.0
    %87 = vmatprep.subr.mxu0 0.0
    %88 = vmatpush1.msra.mxu0 0.0
    %89 = vmatprep.subr.mxu0 0.0
    %90 = vmatpush1.msra.mxu0 0.0
    %91 = vmatprep.subr.mxu0 0.0
    %92 = vmatpush1.msra.mxu0 0.0
    %93 = vmatprep.subr.mxu0 0.0
    %94 = vmatpush1.msra.mxu0 0.0
    %95 = vmatprep.subr.mxu0 0.0
    %96 = vmatpush1.msra.mxu0 0.0
    %97 = vmatprep.subr.mxu0 0.0
    %98 = vmatpush1.msra.mxu0 0.0
    %99 = vmatprep.subr.mxu0 0.0
    %100 = vmatpush1.msra.mxu0 0.0
    %101 = vmatprep.subr.mxu0 0.0
    %102 = vmatpush1.msra.mxu0 0.0
    %103 = vmatprep.subr.mxu0 0.0
    %104 = vmatpush1.msra.mxu0 0.0
    %105 = vmatprep.subr.mxu0 0.0
    %106 = vmatpush1.msra.mxu0 0.0
    %107 = vmatprep.subr.mxu0 0.0
    %108 = vmatpush1.msra.mxu0 0.0
    %109 = vmatprep.subr.mxu0 0.0
    %110 = vmatpush1.msra.mxu0 0.0
    %111 = vmatprep.subr.mxu0 0.0
    %112 = vmatpush1.msra.mxu0 0.0
    %113 = vmatprep.subr.mxu0 0.0
    %114 = vmatpush1.msra.mxu0 0.0
    %115 = vmatprep.subr.mxu0 0.0
    %116 = vmatpush1.msra.mxu0 0.0
    %117 = vmatprep.subr.mxu0 0.0
    %118 = vmatpush1.msra.mxu0 0.0
    %119 = vmatprep.subr.mxu0 0.0
    %120 = vmatpush1.msra.mxu0 0.0
    %121 = vmatprep.subr.mxu0 0.0
    %122 = vmatpush1.msra.mxu0 0.0
    %123 = vmatprep.subr.mxu0 0.0
    %124 = vmatpush1.msra.mxu0 0.0
    %125 = vmatprep.subr.mxu0 0.0
    %126 = vmatpush1.msra.mxu0 0.0
    %127 = vmatprep.subr.mxu0 0.0
    %128 = vmatpush1.msra.mxu0 0.0
    %129 = vmatprep.subr.mxu0 0.0
    %130 = vmatpush1.msra.mxu0 0.0
    %131 = vmatprep.mubr.f32.mxu0 0.0
    %132 = vmatmul.mubr.f32.gmra.mrb[0].mxu0 %v52
    %v133 = vpop.f32.mrb[0].mxu0
    %v134 = vadd.f32 0.0, %v133
    %v135 = vpop.f32.mrb[0].mxu0
    %v136 = vadd.f32 0.0, %v135
    %137 = vdwg.mxu0
    %138 = vmatprep.subr.mxu0 %v33
    %139 = vmatpush1.msra.mxu0 %v32
    %140 = vmatprep.subr.mxu0 %v37
    %141 = vmatpush1.msra.mxu0 %v36
    %142 = vmatprep.subr.mxu0 %v41
    %143 = vmatpush1.msra.mxu0 %v40
    %144 = vmatprep.subr.mxu0 %v45
    %145 = vmatpush1.msra.mxu0 %v44
    %146 = vmatprep.subr.mxu0 %v65
    %147 = vmatpush1.msra.mxu0 %v62
    %148 = vmatprep.subr.mxu0 0.0
    %149 = vmatpush1.msra.mxu0 0.0
    %150 = vmatprep.subr.mxu0 0.0
    %151 = vmatpush1.msra.mxu0 0.0
    %152 = vmatprep.subr.mxu0 0.0
    %153 = vmatpush1.msra.mxu0 0.0
    %154 = vmatprep.subr.mxu0 0.0
    %155 = vmatpush1.msra.mxu0 0.0
    %156 = vmatprep.subr.mxu0 0.0
    %157 = vmatpush1.msra.mxu0 0.0
    %158 = vmatprep.subr.mxu0 0.0
    %159 = vmatpush1.msra.mxu0 0.0
    %160 = vmatprep.subr.mxu0 0.0
    %161 = vmatpush1.msra.mxu0 0.0
    %162 = vmatprep.subr.mxu0 0.0
    %163 = vmatpush1.msra.mxu0 0.0
    %164 = vmatprep.subr.mxu0 0.0
    %165 = vmatpush1.msra.mxu0 0.0
    %166 = vmatprep.subr.mxu0 0.0
    %167 = vmatpush1.msra.mxu0 0.0
    %168 = vmatprep.subr.mxu0 0.0
    %169 = vmatpush1.msra.mxu0 0.0
    %170 = vmatprep.subr.mxu0 0.0
    %171 = vmatpush1.msra.mxu0 0.0
    %172 = vmatprep.subr.mxu0 0.0
    %173 = vmatpush1.msra.mxu0 0.0
    %174 = vmatprep.subr.mxu0 0.0
    %175 = vmatpush1.msra.mxu0 0.0
    %176 = vmatprep.subr.mxu0 0.0
    %177 = vmatpush1.msra.mxu0 0.0
    %178 = vmatprep.subr.mxu0 0.0
    %179 = vmatpush1.msra.mxu0 0.0
    %180 = vmatprep.subr.mxu0 0.0
    %181 = vmatpush1.msra.mxu0 0.0
    %182 = vmatprep.subr.mxu0 0.0
    %183 = vmatpush1.msra.mxu0 0.0
    %184 = vmatprep.subr.mxu0 0.0
    %185 = vmatpush1.msra.mxu0 0.0
    %186 = vmatprep.subr.mxu0 0.0
    %187 = vmatpush1.msra.mxu0 0.0
    %188 = vmatprep.subr.mxu0 0.0
    %189 = vmatpush1.msra.mxu0 0.0
    %190 = vmatprep.subr.mxu0 0.0
    %191 = vmatpush1.msra.mxu0 0.0
    %192 = vmatprep.subr.mxu0 0.0
    %193 = vmatpush1.msra.mxu0 0.0
    %194 = vmatprep.subr.mxu0 0.0
    %195 = vmatpush1.msra.mxu0 0.0
    %196 = vmatprep.subr.mxu0 0.0
    %197 = vmatpush1.msra.mxu0 0.0
    %198 = vmatprep.subr.mxu0 0.0
    %199 = vmatpush1.msra.mxu0 0.0
    %200 = vmatprep.subr.mxu0 0.0
    %201 = vmatpush1.msra.mxu0 0.0
    %202 = vmatprep.mubr.f32.mxu0 0.0
    %203 = vmatmul.mubr.f32.gmra.mrb[0].mxu0 %v52
    %v204 = vpop.f32.mrb[0].mxu0
    %v205 = vadd.f32 0.0, %v204
    %v206 = vpop.f32.mrb[0].mxu0
    %v207 = vadd.f32 0.0, %v206
    %208 = vdwg.mxu0
    %v209 = vadd.f32 %v134, %v136
    %v210 = vadd.f32 %v209, %v205
    %v211 = vadd.f32 %v210, %v207
    %212 = vadd.xlane.f32.xlu0 %v211
    %v213 = vpop.xlane.xlu0 %212
    %v214 = vmul.f32 %v134, %v134
    %v215 = vmul.f32 %v136, %v136
    %v216 = vmul.f32 %v205, %v205
    %v217 = vmul.f32 %v207, %v207
    %v218 = vadd.f32 %v214, %v215
    %v219 = vadd.f32 %v218, %v216
    %v220 = vadd.f32 %v219, %v217
    %221 = vadd.xlane.f32.xlu0 %v220
    %v222 = vpop.xlane.xlu0 %221
    %v223 = vrcp.pop 512.0
    %v224 = vmul.f32 %v213, %v223
    %v225 = vmul.f32 %v222, %v223
    %v226 = vmul.f32 %v224, %v224
    %v227 = vsub.f32 %v225, %v226
    %v228 = vld [vmem:[%s2] sm:$0xff]
    %v229 = vadd.f32 %v227, 1e-05
    %v230 = vrsqrt.pop %v229
    %v231 = vmul.f32 %v228, %v230
    %v232 = vmul.f32 %v224, %v231
    %234 = vrot.lane.b32.xlu0 %v232, 1
    %v235 = vpop.permute.xlu0 %234
    %v237 = vsub.f32 %v228, %v235
    %239 = vset.pattern.permute.xlu0 0
    %240 = vperm.xlu0 %239, %v231
    %v241 = vpop.permute.xlu0 %240
    %v243 = vmul.f32 %v134, %v241
    %v244 = vmul.f32 %v136, %v241
    %v245 = vmul.f32 %v205, %v241
    %v246 = vmul.f32 %v207, %v241
    %248 = vset.pattern.permute.xlu0 1
    %249 = vperm.xlu0 %248, %v237
    %v250 = vpop.permute.xlu0 %249
    %v252 = vadd.f32 %v243, %v250
    %v253 = vadd.f32 %v244, %v250
    %v254 = vadd.f32 %v245, %v250
    %v255 = vadd.f32 %v246, %v250
    %v256 = vmax.f32 %v252, 0.0
    %v257 = vmax.f32 %v253, 0.0
    %v258 = vmax.f32 %v254, 0.0
    %v259 = vmax.f32 %v255, 0.0
    %260 = vst [vmem:[#allocation5] sm:$0xff] %v256
    %261 = vst [vmem:[#allocation5 + $0x8] sm:$0xff] %v257
    %262 = vst [vmem:[#allocation5 + $0x10] sm:$0xff] %v258
    %263 = vst [vmem:[#allocation5 + $0x18] sm:$0xff] %v259
    // Predicated region
    $region18: #{tpu_custom_call.1} parent=1 // pred_check
      _
    $region19: #{tpu_custom_call.1} parent=1 // pred_check_branch
      %265 = sbr.rel (0) target = $region21
    $region20: #{tpu_custom_call.1} parent=1 // pred_region
      %s267 = ssub.s32 512, 512
      %268 = vsyncadd [#allocation4], %s267
      %s270 = sshll.u32 [#allocation5], 4
      %s271 = int_to_ptr.vmem [resolvable:$true] %s270
      %273 = dma.vmem_to_hbm [thread:$0]  %s271, 512, %s3, [#allocation4]
    $region21: #{tpu_custom_call.1} parent=1 // pred_fallthru
      _
    // Predicated region
    $region22: #{tpu_custom_call.1} parent=1 // pred_check
      _
    $region23: #{tpu_custom_call.1} parent=1 // pred_check_branch
      %275 = sbr.rel (0) target = $region25
    $region24: #{tpu_custom_call.1} parent=1 // pred_region
      %276 = dma.done [#allocation4], 512
    $region25: #{tpu_custom_call.1} parent=1 // pred_fallthru
      _
    %277 = vsyncpa [#allocation3], 1
    %278 = vsyncpa [#allocation4], 1

</llo_original>
